<compile_context>
chip_gen: v7x
topology: tpu7x:2x2x1
jax: 0.10.0
libtpu: 0.0.40
codegen_flags: <defaults>
</compile_context>

<pallas_src>
import functools

import jax
import jax.numpy as jnp
from jax import lax
from jax.experimental import pallas as pl
from jax.experimental.pallas import tpu as pltpu


_INV_SQRT2 = 0.7071067811865476
_SQRT_2_OVER_PI = 0.7978845608028654
_GELU_TANH_C = 0.044715
_LANE = 128


def _msgelu_kernel(x_ref, p_ref, o_ref, *, approximate):
    """o = (0.5*gamma) * u * (1 + erf(u/sqrt2)),  u = alpha*x + beta  (per row)."""
    x = x_ref[...].astype(jnp.float32)
    p = p_ref[...]                    # (block_rows, 3) float32
    a = p[:, 0:1]                     # broadcasts over the column axis
    b = p[:, 1:2]
    g_half = p[:, 2:3]                # 0.5 * gamma, folded in the wrapper
    u = a * x + b
    if approximate:
        # tanh GELU: the transcendental issues on the EUP slot (v7x / bf16 path).
        inner = _SQRT_2_OVER_PI * (u + _GELU_TANH_C * (u * u * u))
        out = (g_half * u) * (1.0 + jnp.tanh(inner))
    else:
        # exact erf GELU (matches torch.nn.functional.gelu default)
        out = (g_half * u) * (1.0 + lax.erf(u * _INV_SQRT2))
    o_ref[...] = out.astype(o_ref.dtype)


def _sublane_multiple(itemsize):
    # f32 -> 8, bf16 -> 16, int8/fp8 -> 32 (packed sublane tiling)
    return max(8, 32 // itemsize)


def _device_kind():
    try:
        return jax.devices()[0].device_kind.lower()
    except Exception:
        return ""


def _choose_tiles(rows, hw, itemsize, target_bytes):
    """Pick (block_rows, block_cols) for a (rows, hw) slab — no wrapper padding."""
    sub = _sublane_multiple(itemsize)
    padded_hw = pl.cdiv(hw, _LANE) * _LANE

    # Prefer full-width blocks (contiguous HBM range => single flat DMA per tile);
    # only tile the column axis if one sublane strip of full width blows the budget.
    if sub * padded_hw * itemsize <= target_bytes:
        block_cols = hw
    else:
        block_cols = max(_LANE, (target_bytes // (sub * itemsize)) // _LANE * _LANE)
        block_cols = min(block_cols, padded_hw)
        if block_cols >= hw:
            block_cols = hw

    bytes_per_row = pl.cdiv(block_cols, _LANE) * _LANE * itemsize
    block_rows = max(sub, (target_bytes // bytes_per_row) // sub * sub)
    if block_rows >= rows:
        block_rows = rows  # single row-block; full-extent dims are always legal

    # Keep >=2 blocks along a parallel axis when possible (v7x megacore sharding).
    if pl.cdiv(rows, block_rows) * pl.cdiv(hw, block_cols) == 1 and rows >= 2 * sub:
        block_rows = pl.cdiv(pl.cdiv(rows, 2), sub) * sub

    return block_rows, block_cols


def multi_scaled_gelu(x_nchw, alpha, beta, gamma, *,
                      approximate=None, target_block_bytes=None,
                      buffer_count=None):
    """x_nchw: (N, C, H, W); alpha/beta/gamma: (C,). Returns (N, C, H, W)."""
    N, C, H, W = x_nchw.shape
    rows, hw = N * C, H * W
    dtype = x_nchw.dtype
    itemsize = jnp.dtype(dtype).itemsize
    sub = _sublane_multiple(itemsize)

    kind = _device_kind()
    is_v7 = "v7" in kind
    if approximate is None:
        # On v7x the erf polynomial can make the VALU slot the binder at 3.2 TB/s;
        # tanh runs on the EUP slot and keeps the kernel at the HBM roofline.
        approximate = is_v7
    if target_block_bytes is None:
        target_block_bytes = (8 << 20) if is_v7 else (4 << 20)

    # Lane-dense 2-D view; trivial reshape, no extra HBM pass.
    x2d = x_nchw.reshape(rows, hw)

    block_rows, block_cols = _choose_tiles(rows, hw, itemsize, target_block_bytes)
    grid = (pl.cdiv(rows, block_rows), pl.cdiv(hw, block_cols))

    # One stacked param array, kept in f32 (tiny; avoids double-rounding for bf16 x).
    params = jnp.stack([alpha, beta, 0.5 * gamma], axis=-1).astype(jnp.float32)  # (C, 3)
    params = jnp.tile(params, (N, 1))                                            # (rows, 3)

    spec_kwargs = {}
    if buffer_count is not None:   # opt-in deeper pipelining (sweep on v7x)
        spec_kwargs["pipeline_mode"] = pl.Buffered(buffer_count)
    data_block = (block_rows, block_cols)
    x_spec = pl.BlockSpec(data_block, lambda i, j: (i, j), **spec_kwargs)
    o_spec = pl.BlockSpec(data_block, lambda i, j: (i, j))
    # Param block index constant over the column axis -> one small DMA per row block.
    p_spec = pl.BlockSpec((block_rows, 3), lambda i, j: (i, 0))

    # VMEM budget from the lane/sublane-padded block footprint; capped at 48 MiB
    # so it also fits v7x's 64 MiB per-core VMEM with headroom.
    pr = pl.cdiv(block_rows, sub) * sub
    pc = pl.cdiv(block_cols, _LANE) * _LANE
    n_in_bufs = 2 if buffer_count is None else buffer_count
    x_block_bytes = pr * pc * itemsize
    p_block_bytes = pr * _LANE * 4
    vmem_limit = int(min(max(32 << 20,
                             (n_in_bufs + 2) * x_block_bytes
                             + 2 * p_block_bytes + (4 << 20)),
                         48 << 20))

    nelem = rows * hw
    cost = pl.CostEstimate(
        flops=8 * nelem,
        transcendentals=nelem,
        bytes_accessed=2 * nelem * itemsize + rows * 3 * 4,
    )

    out2d = pl.pallas_call(
        functools.partial(_msgelu_kernel, approximate=approximate),
        out_shape=jax.ShapeDtypeStruct((rows, hw), dtype),
        grid_spec=pltpu.PrefetchScalarGridSpec(
            num_scalar_prefetch=0,
            grid=grid,
            in_specs=[x_spec, p_spec],
            out_specs=o_spec,
        ),
        compiler_params=pltpu.CompilerParams(
            dimension_semantics=("parallel", "parallel"),
            vmem_limit_bytes=vmem_limit,
        ),
        cost_estimate=cost,
    )(x2d, params)

    return out2d.reshape(N, C, H, W)


def _init_params(key, num_channels, dtype=jnp.float32):
    """Mirror the PyTorch __init__: randn(C) normalized to unit L2 norm."""
    ka, kb, kg = jax.random.split(key, 3)

    def unit(k):
        v = jax.random.normal(k, (num_channels,), dtype=dtype)
        return v / jnp.linalg.norm(v)

    return unit(ka), unit(kb), unit(kg)


def _reference(x, alpha, beta, gamma):
    """Pure-JAX reference of the PyTorch forward (NCHW broadcasting, exact GELU)."""
    a = alpha.reshape(1, -1, 1, 1).astype(jnp.float32)
    b = beta.reshape(1, -1, 1, 1).astype(jnp.float32)
    g = gamma.reshape(1, -1, 1, 1).astype(jnp.float32)
    u = a * x.astype(jnp.float32) + b
    return (g * (0.5 * u * (1.0 + lax.erf(u * _INV_SQRT2)))).astype(x.dtype)


if __name__ == "__main__":
    key = jax.random.PRNGKey(0)
    k_param, k_data = jax.random.split(key)

    # Primary (aligned) shape.
    N, C, H, W = 2, 4, 16, 16
    alpha, beta, gamma = _init_params(k_param, C)
    x = jax.random.normal(k_data, (N, C, H, W), dtype=jnp.float32)

    out = jax.block_until_ready(
        multi_scaled_gelu(x, alpha, beta, gamma, approximate=False))
    ref = _reference(x, alpha, beta, gamma)
    assert out.shape == (N, C, H, W)
    assert jnp.allclose(out, ref, atol=1e-5, rtol=1e-5), "mismatch (exact erf path)"

    # tanh path (v7x / EUP route) — looser tolerance vs the exact-erf reference.
    out_t = jax.block_until_ready(
        multi_scaled_gelu(x, alpha, beta, gamma, approximate=True))
    assert jnp.allclose(out_t, ref, atol=2e-2, rtol=2e-2), "mismatch (tanh path)"

    # Misaligned shape: handled with full-extent blocks, no wrapper pad/slice.
    N2, C2, H2, W2 = 2, 3, 5, 7
    a2, b2, g2 = _init_params(k_param, C2)
    x2 = jax.random.normal(k_data, (N2, C2, H2, W2), dtype=jnp.float32)
    out2 = jax.block_until_ready(
        multi_scaled_gelu(x2, a2, b2, g2, approximate=False))
    assert jnp.allclose(out2, _reference(x2, a2, b2, g2), atol=1e-5, rtol=1e-5), \
        "mismatch (misaligned full-extent path)"

    # Tiny block budget -> column-tiled grid with a masked ragged tail block.
    N3, C3, H3, W3 = 2, 4, 20, 20
    a3, b3, g3 = _init_params(k_param, C3)
    x3 = jax.random.normal(k_data, (N3, C3, H3, W3), dtype=jnp.float32)
    out3 = jax.block_until_ready(
        multi_scaled_gelu(x3, a3, b3, g3, approximate=False,
                          target_block_bytes=8 * 1024))
    assert jnp.allclose(out3, _reference(x3, a3, b3, g3), atol=1e-5, rtol=1e-5), \
        "mismatch (ragged-tail tiled path)"

    print("KERNEL_OK")
</pallas_src>

<mosaic_0001>
module attributes {stable_mosaic.version = 11 : i64} {
  func.func @_msgelu_kernel(%arg0: i32, %arg1: i32, %arg2: memref<8x256xf32, #tpu.memory_space<vmem>>, %arg3: memref<8x3xf32, #tpu.memory_space<vmem>>, %arg4: memref<8x256xf32, #tpu.memory_space<vmem>>) attributes {dimension_semantics = [#tpu.dimension_semantics<parallel>, #tpu.dimension_semantics<parallel>], iteration_bounds = array<i64: 1, 1>, scalar_prefetch = 0 : i64, scratch_operands = 0 : i64, tpu.core_type = #tpu.core_type<tc>, window_params = [{transform_indices = @transform_0, window_bounds = array<i64: 8, 256>}, {transform_indices = @transform_1, window_bounds = array<i64: 8, 3>}, {transform_indices = @transform_2, window_bounds = array<i64: 8, 256>}]} {
    %c0 = arith.constant 0 : index
    %c0_0 = arith.constant 0 : index
    %0 = vector.load %arg2[%c0, %c0_0] : memref<8x256xf32, #tpu.memory_space<vmem>>, vector<8x256xf32>
    %c0_1 = arith.constant 0 : index
    %c0_2 = arith.constant 0 : index
    %1 = vector.load %arg3[%c0_1, %c0_2] : memref<8x3xf32, #tpu.memory_space<vmem>>, vector<8x3xf32>
    %2 = vector.extract_strided_slice %1 {offsets = [0, 0], sizes = [8, 1], strides = [1, 1]} : vector<8x3xf32> to vector<8x1xf32>
    %3 = vector.extract_strided_slice %1 {offsets = [0, 1], sizes = [8, 1], strides = [1, 1]} : vector<8x3xf32> to vector<8x1xf32>
    %4 = vector.extract_strided_slice %1 {offsets = [0, 2], sizes = [8, 1], strides = [1, 1]} : vector<8x3xf32> to vector<8x1xf32>
    %5 = vector.broadcast %2 : vector<8x1xf32> to vector<8x256xf32>
    %6 = arith.mulf %5, %0 : vector<8x256xf32>
    %7 = vector.broadcast %3 : vector<8x1xf32> to vector<8x256xf32>
    %8 = arith.addf %6, %7 : vector<8x256xf32>
    %9 = vector.broadcast %4 : vector<8x1xf32> to vector<8x256xf32>
    %10 = arith.mulf %9, %8 : vector<8x256xf32>
    %cst = arith.constant 0.707106769 : f32
    %11 = vector.broadcast %cst : f32 to vector<8x256xf32>
    %12 = arith.mulf %8, %11 : vector<8x256xf32>
    %13 = math.erf %12 : vector<8x256xf32>
    %cst_3 = arith.constant 1.000000e+00 : f32
    %14 = vector.broadcast %cst_3 : f32 to vector<8x256xf32>
    %15 = arith.addf %14, %13 : vector<8x256xf32>
    %16 = arith.mulf %10, %15 : vector<8x256xf32>
    %c0_4 = arith.constant 0 : index
    %c0_5 = arith.constant 0 : index
    %17 = vector.load %arg4[%c0_4, %c0_5] : memref<8x256xf32, #tpu.memory_space<vmem>>, vector<8x256xf32>
    tpu.vector_store %arg4[%c0_4, %c0_5], %16 {strides = array<i32>} : memref<8x256xf32, #tpu.memory_space<vmem>>, vector<8x256xf32>,
    return
  }
  func.func @transform_0(%arg0: i32, %arg1: i32) -> (i32, i32) {
    %c0_i32 = arith.constant 0 : i32
    return %arg0, %arg1 : i32, i32
  }
  func.func @transform_1(%arg0: i32, %arg1: i32) -> (i32, i32) {
    %c0_i32 = arith.constant 0 : i32
    %c0_i32_0 = arith.constant 0 : i32
    return %arg0, %c0_i32 : i32, i32
  }
  func.func @transform_2(%arg0: i32, %arg1: i32) -> (i32, i32) {
    %c0_i32 = arith.constant 0 : i32
    return %arg0, %arg1 : i32, i32
  }
}

</mosaic_0001>

<llo_original>
// kernel: tpu_custom_call.1
$region0: #{tpu_custom_call.1}
  #allocation0 [shape = 'u32[]', space=smem, size = 0x4, offset = 0x4, fixed_abs, tag = 'smem constant byte address 0x4 - core index']
  #allocation1 [shape = 'u32[144,128]{1,0:T(1,128)}', space=vmem, size = 0x12000, scoped, tag = 'internal scratch']
  %s0 = inlined_call_operand.hbm [shape: f32[8,256], index: 0, kind: input, shape index: {}]
  %s1 = inlined_call_operand.vmem [shape: f32[8,3], index: 1, kind: input, shape index: {}]
  %s2 = inlined_call_operand.hbm [shape: f32[8,256], index: 2, kind: output, shape index: {}]
  %s3 = sld [smem:[#allocation0]]
  $region22: #{tpu_custom_call.1} parent=0
    _
  %s5 = ssub.s32 1, %s3
  %s6 = scalar_select 0, %s5, %s3
  $region1: #{tpu_custom_call.1} parent=0
    #allocation2 [shape = 'u8[8192]{0}', space=vmem, size = 0x2000, scoped, tag = 'input window, operand 0, single buffered']
    #allocation3 [shape = 's32[1]{0}', space=sflag, size = 0x4, scoped, tag = 'scoped memory for tpu_custom_call.1']
    #allocation4 [shape = 's32[1]{0}', space=sflag, size = 0x4, scoped, tag = 'scoped memory for tpu_custom_call.1']
    #allocation5 [shape = 'u8[8192]{0}', space=vmem, size = 0x2000, scoped, tag = 'output window, operand 0, single buffered']
    %7 = vsyncpa [#allocation3], 0
    %8 = vsyncpa [#allocation4], 0
    // Predicated region
    $region2: #{tpu_custom_call.1} parent=1 // pred_check
      _
    $region3: #{tpu_custom_call.1} parent=1 // pred_check_branch
      %10 = sbr.rel (0) target = $region5
    $region4: #{tpu_custom_call.1} parent=1 // pred_region
      %s12 = ssub.s32 256, 256
      %13 = vsyncadd [#allocation3], %s12
      %s15 = sshll.u32 [#allocation2], 4
      %s16 = int_to_ptr.vmem [resolvable:$true] %s15
      %18 = dma.hbm_to_vmem [thread:$0]  %s0, 256, %s16, [#allocation3]
    $region5: #{tpu_custom_call.1} parent=1 // pred_fallthru
      _
    // Predicated region
    $region6: #{tpu_custom_call.1} parent=1 // pred_check
      _
    $region7: #{tpu_custom_call.1} parent=1 // pred_check_branch
      %20 = sbr.rel (0) target = $region9
    $region8: #{tpu_custom_call.1} parent=1 // pred_region
      _
    $region9: #{tpu_custom_call.1} parent=1 // pred_fallthru
      _
    // Predicated region
    $region10: #{tpu_custom_call.1} parent=1 // pred_check
      _
    $region11: #{tpu_custom_call.1} parent=1 // pred_check_branch
      %22 = sbr.rel (0) target = $region13
    $region12: #{tpu_custom_call.1} parent=1 // pred_region
      %23 = dma.done [#allocation3], 256
    $region13: #{tpu_custom_call.1} parent=1 // pred_fallthru
      _
    %v24 = vld [vmem:[#allocation2] sm:$0xff]
    %v25 = vld [vmem:[#allocation2 + $0x8] sm:$0xff]
    %v26 = vld [vmem:[%s1] sm:$0xff]
    %28 = vset.pattern.permute.xlu0 0
    %29 = vperm.xlu0 %28, %v26
    %v30 = vpop.permute.xlu0 %29
    %v32 = vmul.f32 %v30, %v24
    %v33 = vmul.f32 %v30, %v25
    %34 = vset.pattern.permute.xlu0 1
    %35 = vperm.xlu0 %34, %v26
    %v36 = vpop.permute.xlu0 %35
    %v38 = vadd.f32 %v32, %v36
    %v39 = vadd.f32 %v33, %v36
    %40 = vset.pattern.permute.xlu0 2
    %41 = vperm.xlu0 %40, %v26
    %v42 = vpop.permute.xlu0 %41
    %v44 = vmul.f32 %v42, %v38
    %v45 = vmul.f32 %v42, %v39
    %v46 = vmul.f32 %v38, 0.70710677
    %v47 = vmul.f32 %v39, 0.70710677
    %v48 = verf.f32.pop %v46
    %v49 = verf.f32.pop %v47
    %v50 = vadd.f32 %v48, 1.0
    %v51 = vadd.f32 %v49, 1.0
    %v52 = vmul.f32 %v44, %v50
    %v53 = vmul.f32 %v45, %v51
    %54 = vst [vmem:[#allocation5] sm:$0xff] %v52
    %55 = vst [vmem:[#allocation5 + $0x8] sm:$0xff] %v53
    // Predicated region
    $region14: #{tpu_custom_call.1} parent=1 // pred_check
      _
    $region15: #{tpu_custom_call.1} parent=1 // pred_check_branch
      %57 = sbr.rel (0) target = $region17
    $region16: #{tpu_custom_call.1} parent=1 // pred_region
      %s59 = ssub.s32 256, 256
      %60 = vsyncadd [#allocation4], %s59
      %s62 = sshll.u32 [#allocation5], 4
      %s63 = int_to_ptr.vmem [resolvable:$true] %s62
      %65 = dma.vmem_to_hbm [thread:$0]  %s63, 256, %s2, [#allocation4]
    $region17: #{tpu_custom_call.1} parent=1 // pred_fallthru
      _
    // Predicated region
    $region18: #{tpu_custom_call.1} parent=1 // pred_check
      _
    $region19: #{tpu_custom_call.1} parent=1 // pred_check_branch
      %67 = sbr.rel (0) target = $region21
    $region20: #{tpu_custom_call.1} parent=1 // pred_region
      %68 = dma.done [#allocation4], 256
    $region21: #{tpu_custom_call.1} parent=1 // pred_fallthru
      _
    %69 = vsyncpa [#allocation3], 1
    %70 = vsyncpa [#allocation4], 1

</llo_original>
